<compile_context>
chip_gen: v5e
topology: v5e:2x2
jax: 0.10.0
libtpu: 0.0.40
codegen_flags: <defaults>
</compile_context>

<pallas_src>
import functools

import numpy as np
import jax
import jax.numpy as jnp
from jax.experimental import pallas as pl
from jax.experimental.pallas import tpu as pltpu

L = 28            # sequence length implied by fc1 (84 = 3 * 28)
C1 = 32           # conv1 out channels
C2 = 3            # conv2 out channels
H1 = 250          # fc1 hidden
OUT = 2           # fc2 out
KSZ = 3           # conv kernel size

LC2_PAD = 128     # L*C2 = 84 zero-padded to a full lane group
H1_PAD = 256      # 250 zero-padded to a multiple of 128
OUT_PAD = 128     # lane-dense padded output width
MAX_TILE = 512    # max batch-tile rows per grid step

RRELU_SLOPE = (1.0 / 8.0 + 1.0 / 3.0) / 2.0   # eval-mode deterministic rrelu slope


def _round_up(n, m):
    return ((n + m - 1) // m) * m


def _device_kind():
    try:
        return jax.devices()[0].device_kind.lower()
    except Exception:
        return ""


# bf16 elementwise only where the VPU supports it (v6e / v7x); v5e/unknown stay f32.
_BF16_ELEMENTWISE = any(tag in _device_kind() for tag in ("v6", "v7"))
_EW_DTYPE = jnp.bfloat16 if _BF16_ELEMENTWISE else jnp.float32


def cnn1d_kernel(x_ref, w1_ref, b1_ref, w2_ref, b2_ref,
                 fc1w_ref, fc1b_ref, fc2w_ref, fc2b_ref, out_ref, *, ew_dtype):
    # Matmuls: bf16 operands, f32 accumulation.  Bias + ReLU in ew_dtype
    # (bf16 on v6e/v7x to halve VALU/staging pressure, f32 elsewhere).
    x = x_ref[...].astype(jnp.bfloat16)                                   # (bB, L)

    # conv1 (banded matmul) + ReLU -> flattened (l*C1 + c) layout
    h1 = jnp.dot(x, w1_ref[...], preferred_element_type=jnp.float32)
    h1 = jnp.maximum(h1.astype(ew_dtype) + b1_ref[...], 0)                # (bB, 896)
    h1 = h1.astype(jnp.bfloat16)

    # conv2 (banded matmul) + ReLU -> flattened (l*C2 + o) layout, padded to 128
    h2 = jnp.dot(h1, w2_ref[...], preferred_element_type=jnp.float32)
    h2 = jnp.maximum(h2.astype(ew_dtype) + b2_ref[...], 0)                # (bB, 128)
    h2 = h2.astype(jnp.bfloat16)

    # fc1 + ReLU (K = 128, N padded to 256; fc1w rows pre-permuted in wrapper)
    f1 = jnp.dot(h2, fc1w_ref[...], preferred_element_type=jnp.float32)
    f1 = jnp.maximum(f1.astype(ew_dtype) + fc1b_ref[...], 0)              # (bB, 256)
    f1 = f1.astype(jnp.bfloat16)

    # fc2 (N padded to 128) + rrelu (eval-mode fixed slope); bias/output in f32
    f2 = jnp.dot(f1, fc2w_ref[...],
                 preferred_element_type=jnp.float32) + fc2b_ref[...]      # (bB, 128)
    out_ref[...] = jnp.where(f2 >= 0.0, f2, f2 * RRELU_SLOPE)


def _prep_params(params):
    """Rearrange PyTorch-layout params into kernel-ready, lane-dense matrices."""
    w1, b1, w2, b2, fc1w, fc1b, fc2w, fc2b = params

    w1_k = w1[:, 0, :].T.astype(jnp.float32)                  # (KSZ, C1): [k, c_out]
    w2_k = jnp.transpose(w2, (2, 1, 0)).astype(jnp.float32)   # (KSZ, C1, C2): [k, c_in, c_out]

    # Banded (Toeplitz) conv matrices; padding=1 boundaries handled by the band mask.
    W1t = jnp.zeros((L, L, C1), jnp.float32)       # [p, l, c] = w1_k[p-l+1, c]
    W2t = jnp.zeros((L, C1, L, C2), jnp.float32)   # [p, c, l, o] = w2_k[p-l+1, c, o]
    for k in range(KSZ):
        ls = np.arange(L)
        ps = ls + (k - 1)
        m = (ps >= 0) & (ps < L)
        W1t = W1t.at[ps[m], ls[m], :].set(w1_k[k])
        W2t = W2t.at[ps[m], :, ls[m], :].set(w2_k[k])
    W1t = W1t.reshape(L, L * C1).astype(jnp.bfloat16)                      # (28, 896)
    W2t = jnp.zeros((L * C1, LC2_PAD), jnp.float32).at[:, :L * C2].set(
        W2t.reshape(L * C1, L * C2)).astype(jnp.bfloat16)                  # (896, 128)

    b1t = jnp.tile(b1.astype(_EW_DTYPE), L).reshape(1, L * C1)             # [l*C1+c] = b1[c]
    b2t = jnp.zeros((1, LC2_PAD), _EW_DTYPE).at[:, :L * C2].set(
        jnp.tile(b2.astype(_EW_DTYPE), L))                                 # [l*C2+o] = b2[o]

    # PyTorch flatten column index is c*L + l; kernel flatten index is l*C2 + c.
    fc1w_r = (fc1w.reshape(H1, C2, L).transpose(2, 1, 0)
              .reshape(L * C2, H1).astype(jnp.float32))                    # (84, 250)
    fc1w_k = jnp.zeros((LC2_PAD, H1_PAD), jnp.float32).at[:L * C2, :H1].set(
        fc1w_r).astype(jnp.bfloat16)                                       # (128, 256)
    fc1b_k = jnp.zeros((1, H1_PAD), _EW_DTYPE).at[:, :H1].set(fc1b.astype(_EW_DTYPE))

    fc2w_k = jnp.zeros((H1_PAD, OUT_PAD), jnp.float32).at[:H1, :OUT].set(
        fc2w.T.astype(jnp.float32)).astype(jnp.bfloat16)                   # (256, 128)
    fc2b_k = jnp.zeros((1, OUT_PAD), jnp.float32).at[:, :OUT].set(
        fc2b.astype(jnp.float32).reshape(1, OUT))

    return (W1t, b1t, W2t, b2t, fc1w_k, fc1b_k, fc2w_k, fc2b_k)


@jax.jit
def cnn1d_forward(x_ncl, params):
    """x_ncl: (B, 1, L) in PyTorch NCL layout."""
    B = x_ncl.shape[0]
    assert x_ncl.shape[1] == 1 and x_ncl.shape[2] == L, x_ncl.shape
    x = x_ncl.reshape(B, L).astype(jnp.float32)        # squeeze trailing-1 channel

    # Batch tile: multiple of 8 sublanes, up to MAX_TILE rows, capped at half the
    # padded batch so the parallel grid has >= 2 steps whenever the batch allows.
    b_rounded = _round_up(B, 8)
    bB = min(MAX_TILE, b_rounded)
    if b_rounded >= 16:
        bB = min(bB, _round_up(b_rounded // 2, 8))
    Bp = _round_up(B, bB)
    if Bp != B:
        x = jnp.pad(x, ((0, Bp - B), (0, 0)))

    kp = _prep_params(params)
    W1t, b1t, W2t, b2t, fc1w_k, fc1b_k, fc2w_k, fc2b_k = kp

    def const(a):   # full-array block, constant index -> DMA'd once, stays resident
        return pl.BlockSpec(a.shape, lambda i, n=a.ndim: (0,) * n)

    flops = 2 * Bp * (L * (L * C1) + (L * C1) * LC2_PAD
                      + LC2_PAD * H1_PAD + H1_PAD * OUT_PAD)
    bytes_accessed = int(
        x.size * 4 + Bp * OUT_PAD * 4
        + sum(int(np.prod(a.shape)) * a.dtype.itemsize for a in kp))

    kernel = functools.partial(cnn1d_kernel, ew_dtype=_EW_DTYPE)
    out = pl.pallas_call(
        kernel,
        out_shape=jax.ShapeDtypeStruct((Bp, OUT_PAD), jnp.float32),
        grid=(Bp // bB,),
        in_specs=[
            pl.BlockSpec((bB, L), lambda i: (i, 0)),     # batch-tiled input
            const(W1t), const(b1t), const(W2t), const(b2t),
            const(fc1w_k), const(fc1b_k), const(fc2w_k), const(fc2b_k),
        ],
        out_specs=pl.BlockSpec((bB, OUT_PAD), lambda i: (i, 0)),
        compiler_params=pltpu.CompilerParams(
            dimension_semantics=("parallel",)),
        cost_estimate=pl.CostEstimate(
            flops=flops, transcendentals=0, bytes_accessed=bytes_accessed),
    )(x, W1t, b1t, W2t, b2t, fc1w_k, fc1b_k, fc2w_k, fc2b_k)

    return out[:B, :OUT]


def init_params(key):
    """Deterministic PyTorch-style (uniform +-1/sqrt(fan_in)) initialization."""
    ks = jax.random.split(key, 8)

    def u(k, shape, fan_in):
        bound = 1.0 / jnp.sqrt(jnp.float32(fan_in))
        return jax.random.uniform(k, shape, jnp.float32, -bound, bound)

    w1 = u(ks[0], (C1, 1, KSZ), 1 * KSZ)       # conv1.weight (out, in, k)
    b1 = u(ks[1], (C1,), 1 * KSZ)
    w2 = u(ks[2], (C2, C1, KSZ), C1 * KSZ)     # conv2.weight
    b2 = u(ks[3], (C2,), C1 * KSZ)
    fc1w = u(ks[4], (H1, C2 * L), C2 * L)      # fc1.weight (out, in)
    fc1b = u(ks[5], (H1,), C2 * L)
    fc2w = u(ks[6], (OUT, H1), H1)             # fc2.weight
    fc2b = u(ks[7], (OUT,), H1)
    return (w1, b1, w2, b2, fc1w, fc1b, fc2w, fc2b)


def ref_forward(x_ncl, params):
    """Pure-JAX f32 reference mirroring the PyTorch forward (correctness check)."""
    w1, b1, w2, b2, fc1w, fc1b, fc2w, fc2b = params

    def conv1d(x, w, b):   # x (B,C,L), w (O,C,K), padding=1
        K = w.shape[2]
        Lx = x.shape[2]
        xp = jnp.pad(x, ((0, 0), (0, 0), (1, 1)))
        win = jnp.stack([xp[:, :, k:k + Lx] for k in range(K)], axis=-1)  # (B,C,L,K)
        return jnp.einsum('bclk,ock->bol', win, w) + b[None, :, None]

    h1 = jax.nn.relu(conv1d(x_ncl, w1, b1))
    h2 = jax.nn.relu(conv1d(h1, w2, b2))
    flat = h2.reshape(x_ncl.shape[0], -1)          # channel-major flatten (c*L + l)
    f1 = jax.nn.relu(flat @ fc1w.T + fc1b)
    f2 = f1 @ fc2w.T + fc2b
    # TODO(synk): torch.rrelu training-mode stochastic slope has no deterministic
    # equivalent; eval-mode fixed slope (1/8 + 1/3)/2 is implemented.
    return jnp.where(f2 >= 0.0, f2, f2 * RRELU_SLOPE)


if __name__ == "__main__":
    key = jax.random.PRNGKey(0)
    kx, kp = jax.random.split(key)
    B = 2
    x = jax.random.normal(kx, (B, 1, L), jnp.float32)   # PyTorch NCL input
    params = init_params(kp)

    out = jax.block_until_ready(cnn1d_forward(x, params))
    ref = ref_forward(x, params)

    assert out.shape == (B, OUT), out.shape
    # bf16 MXU operands (f32 accumulation) vs pure-f32 reference -> loose-ish tol.
    assert jnp.allclose(out, ref, atol=3e-2, rtol=3e-2), (out, ref)
    print("KERNEL_OK")
</pallas_src>

<mosaic_0001>
module attributes {stable_mosaic.version = 11 : i64} {
  func.func @cnn1d_kernel(%arg0: i32, %arg1: memref<8x28xf32, #tpu.memory_space<vmem>>, %arg2: memref<28x896xbf16, #tpu.memory_space<vmem>>, %arg3: memref<1x896xf32, #tpu.memory_space<vmem>>, %arg4: memref<896x128xbf16, #tpu.memory_space<vmem>>, %arg5: memref<1x128xf32, #tpu.memory_space<vmem>>, %arg6: memref<128x256xbf16, #tpu.memory_space<vmem>>, %arg7: memref<1x256xf32, #tpu.memory_space<vmem>>, %arg8: memref<256x128xbf16, #tpu.memory_space<vmem>>, %arg9: memref<1x128xf32, #tpu.memory_space<vmem>>, %arg10: memref<8x128xf32, #tpu.memory_space<vmem>>) attributes {dimension_semantics = [#tpu.dimension_semantics<parallel>], iteration_bounds = array<i64: 1>, scalar_prefetch = 0 : i64, scratch_operands = 0 : i64, tpu.core_type = #tpu.core_type<tc>, window_params = [{transform_indices = @transform_0, window_bounds = array<i64: 8, 28>}, {pipeline_mode = #tpu.pipeline_mode<synchronous>, transform_indices = @transform_1, window_bounds = array<i64: 28, 896>}, {pipeline_mode = #tpu.pipeline_mode<synchronous>, transform_indices = @transform_2, window_bounds = array<i64: 1, 896>}, {pipeline_mode = #tpu.pipeline_mode<synchronous>, transform_indices = @transform_3, window_bounds = array<i64: 896, 128>}, {pipeline_mode = #tpu.pipeline_mode<synchronous>, transform_indices = @transform_4, window_bounds = array<i64: 1, 128>}, {pipeline_mode = #tpu.pipeline_mode<synchronous>, transform_indices = @transform_5, window_bounds = array<i64: 128, 256>}, {pipeline_mode = #tpu.pipeline_mode<synchronous>, transform_indices = @transform_6, window_bounds = array<i64: 1, 256>}, {pipeline_mode = #tpu.pipeline_mode<synchronous>, transform_indices = @transform_7, window_bounds = array<i64: 256, 128>}, {pipeline_mode = #tpu.pipeline_mode<synchronous>, transform_indices = @transform_8, window_bounds = array<i64: 1, 128>}, {transform_indices = @transform_9, window_bounds = array<i64: 8, 128>}]} {
    %c0 = arith.constant 0 : index
    %c0_0 = arith.constant 0 : index
    %0 = vector.load %arg1[%c0, %c0_0] : memref<8x28xf32, #tpu.memory_space<vmem>>, vector<8x28xf32>
    %1 = arith.truncf %0 : vector<8x28xf32> to vector<8x28xbf16>
    %c0_1 = arith.constant 0 : index
    %c0_2 = arith.constant 0 : index
    %2 = vector.load %arg2[%c0_1, %c0_2] : memref<28x896xbf16, #tpu.memory_space<vmem>>, vector<28x896xbf16>
    %cst = arith.constant dense<0.000000e+00> : vector<8x896xf32>
    %3 = tpu.matmul %1, %2, %cst {dimension_numbers = #tpu.dot_dimension_numbers<[1], [0], [0], [1], [0, 0, 1, 1], [], []>} : vector<8x28xbf16>, vector<28x896xbf16>, vector<8x896xf32> -> vector<8x896xf32>
    %c0_3 = arith.constant 0 : index
    %c0_4 = arith.constant 0 : index
    %4 = vector.load %arg3[%c0_3, %c0_4] : memref<1x896xf32, #tpu.memory_space<vmem>>, vector<1x896xf32>
    %5 = vector.broadcast %4 : vector<1x896xf32> to vector<8x896xf32>
    %6 = arith.addf %3, %5 : vector<8x896xf32>
    %cst_5 = arith.constant 0.000000e+00 : f32
    %7 = vector.broadcast %cst_5 : f32 to vector<8x896xf32>
    %8 = arith.maximumf %6, %7 : vector<8x896xf32>
    %9 = arith.truncf %8 : vector<8x896xf32> to vector<8x896xbf16>
    %c0_6 = arith.constant 0 : index
    %c0_7 = arith.constant 0 : index
    %10 = vector.load %arg4[%c0_6, %c0_7] : memref<896x128xbf16, #tpu.memory_space<vmem>>, vector<896x128xbf16>
    %cst_8 = arith.constant dense<0.000000e+00> : vector<8x128xf32>
    %11 = tpu.matmul %9, %10, %cst_8 {dimension_numbers = #tpu.dot_dimension_numbers<[1], [0], [0], [1], [0, 0, 1, 1], [], []>} : vector<8x896xbf16>, vector<896x128xbf16>, vector<8x128xf32> -> vector<8x128xf32>
    %c0_9 = arith.constant 0 : index
    %c0_10 = arith.constant 0 : index
    %12 = vector.load %arg5[%c0_9, %c0_10] : memref<1x128xf32, #tpu.memory_space<vmem>>, vector<1x128xf32>
    %13 = vector.broadcast %12 : vector<1x128xf32> to vector<8x128xf32>
    %14 = arith.addf %11, %13 : vector<8x128xf32>
    %cst_11 = arith.constant 0.000000e+00 : f32
    %15 = vector.broadcast %cst_11 : f32 to vector<8x128xf32>
    %16 = arith.maximumf %14, %15 : vector<8x128xf32>
    %17 = arith.truncf %16 : vector<8x128xf32> to vector<8x128xbf16>
    %c0_12 = arith.constant 0 : index
    %c0_13 = arith.constant 0 : index
    %18 = vector.load %arg6[%c0_12, %c0_13] : memref<128x256xbf16, #tpu.memory_space<vmem>>, vector<128x256xbf16>
    %cst_14 = arith.constant dense<0.000000e+00> : vector<8x256xf32>
    %19 = tpu.matmul %17, %18, %cst_14 {dimension_numbers = #tpu.dot_dimension_numbers<[1], [0], [0], [1], [0, 0, 1, 1], [], []>} : vector<8x128xbf16>, vector<128x256xbf16>, vector<8x256xf32> -> vector<8x256xf32>
    %c0_15 = arith.constant 0 : index
    %c0_16 = arith.constant 0 : index
    %20 = vector.load %arg7[%c0_15, %c0_16] : memref<1x256xf32, #tpu.memory_space<vmem>>, vector<1x256xf32>
    %21 = vector.broadcast %20 : vector<1x256xf32> to vector<8x256xf32>
    %22 = arith.addf %19, %21 : vector<8x256xf32>
    %cst_17 = arith.constant 0.000000e+00 : f32
    %23 = vector.broadcast %cst_17 : f32 to vector<8x256xf32>
    %24 = arith.maximumf %22, %23 : vector<8x256xf32>
    %25 = arith.truncf %24 : vector<8x256xf32> to vector<8x256xbf16>
    %c0_18 = arith.constant 0 : index
    %c0_19 = arith.constant 0 : index
    %26 = vector.load %arg8[%c0_18, %c0_19] : memref<256x128xbf16, #tpu.memory_space<vmem>>, vector<256x128xbf16>
    %cst_20 = arith.constant dense<0.000000e+00> : vector<8x128xf32>
    %27 = tpu.matmul %25, %26, %cst_20 {dimension_numbers = #tpu.dot_dimension_numbers<[1], [0], [0], [1], [0, 0, 1, 1], [], []>} : vector<8x256xbf16>, vector<256x128xbf16>, vector<8x128xf32> -> vector<8x128xf32>
    %c0_21 = arith.constant 0 : index
    %c0_22 = arith.constant 0 : index
    %28 = vector.load %arg9[%c0_21, %c0_22] : memref<1x128xf32, #tpu.memory_space<vmem>>, vector<1x128xf32>
    %29 = vector.broadcast %28 : vector<1x128xf32> to vector<8x128xf32>
    %30 = arith.addf %27, %29 : vector<8x128xf32>
    %cst_23 = arith.constant 0.000000e+00 : f32
    %31 = vector.broadcast %cst_23 : f32 to vector<8x128xf32>
    %32 = arith.cmpf oge, %30, %31 : vector<8x128xf32>
    %cst_24 = arith.constant 0.229166672 : f32
    %33 = vector.broadcast %cst_24 : f32 to vector<8x128xf32>
    %34 = arith.mulf %30, %33 : vector<8x128xf32>
    %35 = arith.select %32, %30, %34 : vector<8x128xi1>, vector<8x128xf32>
    %c0_25 = arith.constant 0 : index
    %c0_26 = arith.constant 0 : index
    %36 = vector.load %arg10[%c0_25, %c0_26] : memref<8x128xf32, #tpu.memory_space<vmem>>, vector<8x128xf32>
    tpu.vector_store %arg10[%c0_25, %c0_26], %35 {strides = array<i32>} : memref<8x128xf32, #tpu.memory_space<vmem>>, vector<8x128xf32>,
    return
  }
  func.func @transform_0(%arg0: i32) -> (i32, i32) {
    %c0_i32 = arith.constant 0 : i32
    %c0_i32_0 = arith.constant 0 : i32
    return %arg0, %c0_i32 : i32, i32
  }
  func.func @transform_1(%arg0: i32) -> (i32, i32) {
    %c0_i32 = arith.constant 0 : i32
    %c0_i32_0 = arith.constant 0 : i32
    %c0_i32_1 = arith.constant 0 : i32
    return %c0_i32, %c0_i32_0 : i32, i32
  }
  func.func @transform_2(%arg0: i32) -> (i32, i32) {
    %c0_i32 = arith.constant 0 : i32
    %c0_i32_0 = arith.constant 0 : i32
    %c0_i32_1 = arith.constant 0 : i32
    return %c0_i32, %c0_i32_0 : i32, i32
  }
  func.func @transform_3(%arg0: i32) -> (i32, i32) {
    %c0_i32 = arith.constant 0 : i32
    %c0_i32_0 = arith.constant 0 : i32
    %c0_i32_1 = arith.constant 0 : i32
    return %c0_i32, %c0_i32_0 : i32, i32
  }
  func.func @transform_4(%arg0: i32) -> (i32, i32) {
    %c0_i32 = arith.constant 0 : i32
    %c0_i32_0 = arith.constant 0 : i32
    %c0_i32_1 = arith.constant 0 : i32
    return %c0_i32, %c0_i32_0 : i32, i32
  }
  func.func @transform_5(%arg0: i32) -> (i32, i32) {
    %c0_i32 = arith.constant 0 : i32
    %c0_i32_0 = arith.constant 0 : i32
    %c0_i32_1 = arith.constant 0 : i32
    return %c0_i32, %c0_i32_0 : i32, i32
  }
  func.func @transform_6(%arg0: i32) -> (i32, i32) {
    %c0_i32 = arith.constant 0 : i32
    %c0_i32_0 = arith.constant 0 : i32
    %c0_i32_1 = arith.constant 0 : i32
    return %c0_i32, %c0_i32_0 : i32, i32
  }
  func.func @transform_7(%arg0: i32) -> (i32, i32) {
    %c0_i32 = arith.constant 0 : i32
    %c0_i32_0 = arith.constant 0 : i32
    %c0_i32_1 = arith.constant 0 : i32
    return %c0_i32, %c0_i32_0 : i32, i32
  }
  func.func @transform_8(%arg0: i32) -> (i32, i32) {
    %c0_i32 = arith.constant 0 : i32
    %c0_i32_0 = arith.constant 0 : i32
    %c0_i32_1 = arith.constant 0 : i32
    return %c0_i32, %c0_i32_0 : i32, i32
  }
  func.func @transform_9(%arg0: i32) -> (i32, i32) {
    %c0_i32 = arith.constant 0 : i32
    %c0_i32_0 = arith.constant 0 : i32
    return %arg0, %c0_i32 : i32, i32
  }
}

</mosaic_0001>

<llo_original>
// kernel: tile.14
$region0: #{tile.14}
  %s0 = inlined_call_operand.vmem [shape: f32[28,32], index: 0, kind: input, shape index: {}]
  %s1 = inlined_call_operand.vmem [shape: f32[1,896], index: 1, kind: output, shape index: {}]
  $region1: #{tile.14} parent=0
    #allocation0 [shape = 'u8[28672]{0}', space=vmem, size = 0x7000, scoped, tag = 'scoped mem for output reshape']
    %v2 = vld [vmem:[%s0] ss:$4 sm:$0x7f]
    %vm3 = vcmask 261120
    %4 = vst.msk [vmem:[#allocation0] ss:$8 sm:$0xf] %vm3, %v2
    %5 = vst.msk [vmem:[#allocation0] ss:$8 sm:$0x70] %vm3, %v2
    %s6 = scalar_lea.vmem %s0, 3
    %v7 = vld [vmem:[%s6] ss:$4 sm:$0x7f]
    %8 = vrot.lane.b32.xlu0 %v7, 96
    %v9 = vpop.permute.xlu0 %8
    %vm10 = vcmask 1048320
    %11 = vst.msk [vmem:[#allocation0] ss:$8 sm:$0xf] %vm10, %v9
    %12 = vst.msk [vmem:[#allocation0] ss:$8 sm:$0x70] %vm10, %v9
    %s13 = scalar_lea.vmem %s0, 2
    %v14 = vld [vmem:[%s13] ss:$4 sm:$0x7f]
    %15 = vrot.lane.b32.xlu0 %v14, 64
    %v16 = vpop.permute.xlu0 %15
    %vm17 = vcmask 785920
    %18 = vst.msk [vmem:[#allocation0] ss:$8 sm:$0xf] %vm17, %v16
    %19 = vst.msk [vmem:[#allocation0] ss:$8 sm:$0x70] %vm17, %v16
    %s20 = scalar_lea.vmem %s0, 1
    %v21 = vld [vmem:[%s20] ss:$4 sm:$0x7f]
    %22 = vrot.lane.b32.xlu0 %v21, 32
    %v23 = vpop.permute.xlu0 %22
    %vm24 = vcmask 523520
    %25 = vst.msk [vmem:[#allocation0] ss:$8 sm:$0xf] %vm24, %v23
    %26 = vst.msk [vmem:[#allocation0] ss:$8 sm:$0x70] %vm24, %v23
    %s28 = ssub.s32 2, 1
    %v29 = vld [vmem:[#allocation0] sm:%s28]
    %s31 = ssub.s32 2, 1
    %32 = vst [vmem:[%s1] sm:%s31] %v29
    %s33 = scalar_lea.vmem [#allocation0], 8
    %v34 = vld [vmem:[%s33] sm:%s28]
    %s36 = ssub.s32 2, 1
    %s37 = scalar_lea.vmem %s1, 1
    %38 = vst [vmem:[%s37] sm:%s36] %v34
    %s39 = scalar_lea.vmem [#allocation0], 16
    %v40 = vld [vmem:[%s39] sm:%s28]
    %s42 = ssub.s32 2, 1
    %s43 = scalar_lea.vmem %s1, 2
    %44 = vst [vmem:[%s43] sm:%s42] %v40
    %s45 = scalar_lea.vmem [#allocation0], 24
    %v46 = vld [vmem:[%s45] sm:%s28]
    %s48 = ssub.s32 2, 1
    %s49 = scalar_lea.vmem %s1, 3
    %50 = vst [vmem:[%s49] sm:%s48] %v46
    %s51 = scalar_lea.vmem [#allocation0], 32
    %v52 = vld [vmem:[%s51] sm:%s28]
    %s54 = ssub.s32 2, 1
    %s55 = scalar_lea.vmem %s1, 4
    %56 = vst [vmem:[%s55] sm:%s54] %v52
    %s57 = scalar_lea.vmem [#allocation0], 40
    %v58 = vld [vmem:[%s57] sm:%s28]
    %s60 = ssub.s32 2, 1
    %s61 = scalar_lea.vmem %s1, 5
    %62 = vst [vmem:[%s61] sm:%s60] %v58
    %s63 = scalar_lea.vmem [#allocation0], 48
    %v64 = vld [vmem:[%s63] sm:%s28]
    %s66 = ssub.s32 2, 1
    %s67 = scalar_lea.vmem %s1, 6
    %68 = vst [vmem:[%s67] sm:%s66] %v64

// kernel: cnn1d_forward.1
$region0: #{cnn1d_forward.1}
  #allocation0 [shape = 'u32[]', space=smem, size = 0x4, offset = 0x4, fixed_abs, tag = 'smem constant byte address 0x4 - core index']
  #allocation1 [shape = 'u32[72,128]{1,0:T(1,128)}', space=vmem, size = 0x9000, scoped, tag = 'internal scratch']
  %s0 = inlined_call_operand.vmem [shape: f32[8,28], index: 0, kind: input, shape index: {}]
  %s1 = inlined_call_operand.vmem [shape: bf16[28,896], index: 1, kind: input, shape index: {}]
  %s2 = inlined_call_operand.vmem [shape: f32[1,896], index: 2, kind: input, shape index: {}]
  %s3 = inlined_call_operand.vmem [shape: bf16[896,128], index: 3, kind: input, shape index: {}]
  %s4 = inlined_call_operand.vmem [shape: f32[1,128], index: 4, kind: input, shape index: {}]
  %s5 = inlined_call_operand.vmem [shape: bf16[128,256], index: 5, kind: input, shape index: {}]
  %s6 = inlined_call_operand.vmem [shape: f32[1,256], index: 6, kind: input, shape index: {}]
  %s7 = inlined_call_operand.vmem [shape: bf16[256,128], index: 7, kind: input, shape index: {}]
  %s8 = inlined_call_operand.vmem [shape: f32[1,128], index: 8, kind: input, shape index: {}]
  %s9 = inlined_call_operand.vmem [shape: f32[8,128], index: 9, kind: output, shape index: {}]
  %s10 = sld [smem:[#allocation0]]
  $region46: #{cnn1d_forward.1} parent=0
    _
  %s12 = ssub.s32 1, %s10
  %s13 = scalar_select 0, %s12, %s10
  // Predicated region
  $region2: #{cnn1d_forward.1} parent=0 // pred_check
    _
  $region3: #{cnn1d_forward.1} parent=0 // pred_check_branch
    %15 = sbr.rel (0) target = $region5
  $region4: #{cnn1d_forward.1} parent=0 // pred_region
    _
  $region5: #{cnn1d_forward.1} parent=0 // pred_fallthru
    _
  // Predicated region
  $region6: #{cnn1d_forward.1} parent=0 // pred_check
    _
  $region7: #{cnn1d_forward.1} parent=0 // pred_check_branch
    %17 = sbr.rel (0) target = $region9
  $region8: #{cnn1d_forward.1} parent=0 // pred_region
    _
  $region9: #{cnn1d_forward.1} parent=0 // pred_fallthru
    _
  // Predicated region
  $region10: #{cnn1d_forward.1} parent=0 // pred_check
    _
  $region11: #{cnn1d_forward.1} parent=0 // pred_check_branch
    %19 = sbr.rel (0) target = $region13
  $region12: #{cnn1d_forward.1} parent=0 // pred_region
    _
  $region13: #{cnn1d_forward.1} parent=0 // pred_fallthru
    _
  // Predicated region
  $region14: #{cnn1d_forward.1} parent=0 // pred_check
    _
  $region15: #{cnn1d_forward.1} parent=0 // pred_check_branch
    %21 = sbr.rel (0) target = $region17
  $region16: #{cnn1d_forward.1} parent=0 // pred_region
    _
  $region17: #{cnn1d_forward.1} parent=0 // pred_fallthru
    _
  // Predicated region
  $region18: #{cnn1d_forward.1} parent=0 // pred_check
    _
  $region19: #{cnn1d_forward.1} parent=0 // pred_check_branch
    %23 = sbr.rel (0) target = $region21
  $region20: #{cnn1d_forward.1} parent=0 // pred_region
    _
  $region21: #{cnn1d_forward.1} parent=0 // pred_fallthru
    _
  // Predicated region
  $region22: #{cnn1d_forward.1} parent=0 // pred_check
    _
  $region23: #{cnn1d_forward.1} parent=0 // pred_check_branch
    %25 = sbr.rel (0) target = $region25
  $region24: #{cnn1d_forward.1} parent=0 // pred_region
    _
  $region25: #{cnn1d_forward.1} parent=0 // pred_fallthru
    _
  // Predicated region
  $region26: #{cnn1d_forward.1} parent=0 // pred_check
    _
  $region27: #{cnn1d_forward.1} parent=0 // pred_check_branch
    %27 = sbr.rel (0) target = $region29
  $region28: #{cnn1d_forward.1} parent=0 // pred_region
    _
  $region29: #{cnn1d_forward.1} parent=0 // pred_fallthru
    _
  // Predicated region
  $region30: #{cnn1d_forward.1} parent=0 // pred_check
    _
  $region31: #{cnn1d_forward.1} parent=0 // pred_check_branch
    %29 = sbr.rel (0) target = $region33
  $region32: #{cnn1d_forward.1} parent=0 // pred_region
    _
  $region33: #{cnn1d_forward.1} parent=0 // pred_fallthru
    _
  // Predicated region
  $region34: #{cnn1d_forward.1} parent=0 // pred_check
    _
  $region35: #{cnn1d_forward.1} parent=0 // pred_check_branch
    %31 = sbr.rel (0) target = $region37
  $region36: #{cnn1d_forward.1} parent=0 // pred_region
    _
  $region37: #{cnn1d_forward.1} parent=0 // pred_fallthru
    _
  %v33 = vld [vmem:[%s0] sm:$0xff]
  %v34 = vpack.c.bf16 %v33, %v33
  %v35 = vld [vmem:[%s1] sm:$0xff]
  %v36 = vld [vmem:[%s1 + $0x8] sm:$0xff]
  %v37 = vld [vmem:[%s1 + $0x10] sm:$0xff]
  %v38 = vld [vmem:[%s1 + $0x18] sm:$0xf]
  %v39 = vld [vmem:[%s1 + $0x1c] sm:$0xff]
  %v40 = vld [vmem:[%s1 + $0x24] sm:$0xff]
  %v41 = vld [vmem:[%s1 + $0x2c] sm:$0xff]
  %v42 = vld [vmem:[%s1 + $0x34] sm:$0xf]
  %v43 = vld [vmem:[%s1 + $0x38] sm:$0xff]
  %v44 = vld [vmem:[%s1 + $0x40] sm:$0xff]
  %v45 = vld [vmem:[%s1 + $0x48] sm:$0xff]
  %v46 = vld [vmem:[%s1 + $0x50] sm:$0xf]
  %v47 = vld [vmem:[%s1 + $0x54] sm:$0x33]
  %v48 = vld [vmem:[%s1 + $0x5c] sm:$0x33]
  %v49 = vld [vmem:[%s1 + $0x64] sm:$0x33]
  %v50 = vld [vmem:[%s1 + $0x6c] sm:$0x3]
  %v51 = vld [vmem:[%s2] sm:$0xff]
  %v53 = vperm.slane %v51, 0
  %v54 = vperm.slane %v51, 1
  %v55 = vperm.slane %v51, 2
  %v56 = vperm.slane %v51, 3
  %v57 = vperm.slane %v51, 4
  %v58 = vperm.slane %v51, 5
  %v59 = vperm.slane %v51, 6
  %v83 = vunpack.c.l.b16 %v35
  %v84 = vunpack.c.h.b16 %v35
  %v85 = vunpack.c.l.b16 %v36
  %v86 = vunpack.c.h.b16 %v36
  %v87 = vunpack.c.l.b16 %v37
  %v88 = vunpack.c.h.b16 %v37
  %v89 = vunpack.c.l.b16 %v38
  %v90 = vunpack.c.l.b16 %v39
  %v91 = vunpack.c.h.b16 %v39
  %v92 = vunpack.c.l.b16 %v40
  %v93 = vunpack.c.h.b16 %v40
  %v94 = vunpack.c.l.b16 %v41
  %v95 = vunpack.c.h.b16 %v41
  %v96 = vunpack.c.l.b16 %v42
  %v97 = vunpack.c.l.b16 %v43
  %v98 = vunpack.c.h.b16 %v43
  %v99 = vunpack.c.l.b16 %v44
  %v100 = vunpack.c.h.b16 %v44
  %v101 = vunpack.c.l.b16 %v45
  %v102 = vunpack.c.h.b16 %v45
  %v103 = vunpack.c.l.b16 %v46
  %v104 = vunpack.c.l.b16 %v47
  %v105 = vunpack.c.h.b16 %v47
  %v106 = vunpack.c.l.b16 %v48
  %v107 = vunpack.c.h.b16 %v48
  %v108 = vunpack.c.l.b16 %v49
  %v109 = vunpack.c.h.b16 %v49
  %v110 = vunpack.c.l.b16 %v50
  %v111 = vpack.c.b16 %v90, %v83
  %v112 = vpack.c.b16 %v91, %v84
  %v113 = vpack.c.b16 %v92, %v85
  %v114 = vpack.c.b16 %v93, %v86
  %v115 = vpack.c.b16 %v94, %v87
  %v116 = vpack.c.b16 %v95, %v88
  %v117 = vpack.c.b16 %v96, %v89
  %v118 = vpack.c.b16 %v104, %v97
  %v119 = vpack.c.b16 %v105, %v98
  %v120 = vpack.c.b16 %v106, %v99
  %v121 = vpack.c.b16 %v107, %v100
  %v122 = vpack.c.b16 %v108, %v101
  %v123 = vpack.c.b16 %v109, %v102
  %v124 = vpack.c.b16 %v110, %v103
  %vm132 = vcmask 228352
  %v134 = vsel %vm132, %v34, 0
  %vm136 = vcmask 1045504
  %v138 = vsel %vm136, %v118, 0
  %v141 = vsel %vm136, %v119, 0
  %v144 = vsel %vm136, %v120, 0
  %v147 = vsel %vm136, %v121, 0
  %v150 = vsel %vm136, %v122, 0
  %v153 = vsel %vm136, %v123, 0
  %v156 = vsel %vm136, %v124, 0
  %158 = vmatpush.bf16.msra.mxu0 0
  %159 = vmatpush.bf16.msra.mxu0 0
  %160 = vmatpush.bf16.msra.mxu0 0
  %161 = vmatpush.bf16.msra.mxu0 0
  %162 = vmatpush.bf16.msra.mxu0 0
  %163 = vmatpush.bf16.msra.mxu0 0
  %164 = vmatpush.bf16.msra.mxu0 %v138
  %165 = vmatpush.bf16.msra.mxu0 %v111
  %166 = vmatmul.bf16.gmra.mxu0 %v134
  %v167 = vpop.f32.mrf.mxu0
  %v168 = vadd.f32 %v53, %v167
  %v169 = vpop.f32.mrf.mxu0
  %170 = vdwg.mxu0
  %171 = vmatpush.bf16.msra.mxu0 0
  %172 = vmatpush.bf16.msra.mxu0 0
  %173 = vmatpush.bf16.msra.mxu0 0
  %174 = vmatpush.bf16.msra.mxu0 0
  %175 = vmatpush.bf16.msra.mxu0 0
  %176 = vmatpush.bf16.msra.mxu0 0
  %177 = vmatpush.bf16.msra.mxu0 %v141
  %178 = vmatpush.bf16.msra.mxu0 %v112
  %179 = vmatmul.bf16.gmra.mxu0 %v134
  %v180 = vpop.f32.mrf.mxu0
  %v181 = vadd.f32 %v54, %v180
  %v182 = vpop.f32.mrf.mxu0
  %183 = vdwg.mxu0
  %184 = vmatpush.bf16.msra.mxu0 0
  %185 = vmatpush.bf16.msra.mxu0 0
  %186 = vmatpush.bf16.msra.mxu0 0
  %187 = vmatpush.bf16.msra.mxu0 0
  %188 = vmatpush.bf16.msra.mxu0 0
  %189 = vmatpush.bf16.msra.mxu0 0
  %190 = vmatpush.bf16.msra.mxu0 %v144
  %191 = vmatpush.bf16.msra.mxu0 %v113
  %192 = vmatmul.bf16.gmra.mxu0 %v134
  %v193 = vpop.f32.mrf.mxu0
  %v194 = vadd.f32 %v55, %v193
  %v195 = vpop.f32.mrf.mxu0
  %196 = vdwg.mxu0
  %197 = vmatpush.bf16.msra.mxu0 0
  %198 = vmatpush.bf16.msra.mxu0 0
  %199 = vmatpush.bf16.msra.mxu0 0
  %200 = vmatpush.bf16.msra.mxu0 0
  %201 = vmatpush.bf16.msra.mxu0 0
  %202 = vmatpush.bf16.msra.mxu0 0
  %203 = vmatpush.bf16.msra.mxu0 %v147
  %204 = vmatpush.bf16.msra.mxu0 %v114
  %205 = vmatmul.bf16.gmra.mxu0 %v134
  %v206 = vpop.f32.mrf.mxu0
  %v207 = vadd.f32 %v56, %v206
  %v208 = vpop.f32.mrf.mxu0
  %209 = vdwg.mxu0
  %210 = vmatpush.bf16.msra.mxu0 0
  %211 = vmatpush.bf16.msra.mxu0 0
  %212 = vmatpush.bf16.msra.mxu0 0
  %213 = vmatpush.bf16.msra.mxu0 0
  %214 = vmatpush.bf16.msra.mxu0 0
  %215 = vmatpush.bf16.msra.mxu0 0
  %216 = vmatpush.bf16.msra.mxu0 %v150
  %217 = vmatpush.bf16.msra.mxu0 %v115
  %218 = vmatmul.bf16.gmra.mxu0 %v134
  %v219 = vpop.f32.mrf.mxu0
  %v220 = vadd.f32 %v57, %v219
  %v221 = vpop.f32.mrf.mxu0
  %222 = vdwg.mxu0
  %223 = vmatpush.bf16.msra.mxu0 0
  %224 = vmatpush.bf16.msra.mxu0 0
  %225 = vmatpush.bf16.msra.mxu0 0
  %226 = vmatpush.bf16.msra.mxu0 0
  %227 = vmatpush.bf16.msra.mxu0 0
  %228 = vmatpush.bf16.msra.mxu0 0
  %229 = vmatpush.bf16.msra.mxu0 %v153
  %230 = vmatpush.bf16.msra.mxu0 %v116
  %231 = vmatmul.bf16.gmra.mxu0 %v134
  %v232 = vpop.f32.mrf.mxu0
  %v233 = vadd.f32 %v58, %v232
  %v234 = vpop.f32.mrf.mxu0
  %235 = vdwg.mxu0
  %236 = vmatpush.bf16.msra.mxu0 0
  %237 = vmatpush.bf16.msra.mxu0 0
  %238 = vmatpush.bf16.msra.mxu0 0
  %239 = vmatpush.bf16.msra.mxu0 0
  %240 = vmatpush.bf16.msra.mxu0 0
  %241 = vmatpush.bf16.msra.mxu0 0
  %242 = vmatpush.bf16.msra.mxu0 %v156
  %243 = vmatpush.bf16.msra.mxu0 %v117
  %244 = vmatmul.bf16.gmra.mxu0 %v134
  %v245 = vpop.f32.mrf.mxu0
  %v246 = vadd.f32 %v59, %v245
  %v247 = vpop.f32.mrf.mxu0
  %248 = vdwg.mxu0
  %v249 = vmax.f32 %v168, 0.0
  %v250 = vmax.f32 %v181, 0.0
  %v251 = vmax.f32 %v194, 0.0
  %v252 = vmax.f32 %v207, 0.0
  %v253 = vmax.f32 %v220, 0.0
  %v254 = vmax.f32 %v233, 0.0
  %v255 = vmax.f32 %v246, 0.0
  %v256 = vpack.c.bf16 %v249, %v249
  %v257 = vpack.c.bf16 %v250, %v250
  %v258 = vpack.c.bf16 %v251, %v251
  %v259 = vpack.c.bf16 %v252, %v252
  %v260 = vpack.c.bf16 %v253, %v253
  %v261 = vpack.c.bf16 %v254, %v254
  %v262 = vpack.c.bf16 %v255, %v255
  %v263 = vld [vmem:[%s3] sm:$0xf]
  %v264 = vld [vmem:[%s3 + $0x4] sm:$0xf]
  %v265 = vld [vmem:[%s3 + $0x8] sm:$0xf]
  %v266 = vld [vmem:[%s3 + $0xc] sm:$0xf]
  %v267 = vld [vmem:[%s3 + $0x10] sm:$0xf]
  %v268 = vld [vmem:[%s3 + $0x14] sm:$0xf]
  %v269 = vld [vmem:[%s3 + $0x18] sm:$0xf]
  %v270 = vld [vmem:[%s3 + $0x1c] sm:$0xf]
  %v271 = vld [vmem:[%s3 + $0x20] sm:$0xf]
  %v272 = vld [vmem:[%s3 + $0x24] sm:$0xf]
  %v273 = vld [vmem:[%s3 + $0x28] sm:$0xf]
  %v274 = vld [vmem:[%s3 + $0x2c] sm:$0xf]
  %v275 = vld [vmem:[%s3 + $0x30] sm:$0xf]
  %v276 = vld [vmem:[%s3 + $0x34] sm:$0xf]
  %v277 = vld [vmem:[%s3 + $0x38] sm:$0xf]
  %v278 = vld [vmem:[%s3 + $0x3c] sm:$0xf]
  %v279 = vld [vmem:[%s3 + $0x40] sm:$0xf]
  %v280 = vld [vmem:[%s3 + $0x44] sm:$0xf]
  %v281 = vld [vmem:[%s3 + $0x48] sm:$0xf]
  %v282 = vld [vmem:[%s3 + $0x4c] sm:$0xf]
  %v283 = vld [vmem:[%s3 + $0x50] sm:$0xf]
  %v284 = vld [vmem:[%s3 + $0x54] sm:$0xf]
  %v285 = vld [vmem:[%s3 + $0x58] sm:$0xf]
  %v286 = vld [vmem:[%s3 + $0x5c] sm:$0xf]
  %v287 = vld [vmem:[%s3 + $0x60] sm:$0xf]
  %v288 = vld [vmem:[%s3 + $0x64] sm:$0xf]
  %v289 = vld [vmem:[%s3 + $0x68] sm:$0xf]
  %v290 = vld [vmem:[%s3 + $0x6c] sm:$0xf]
  %v291 = vld [vmem:[%s3 + $0x70] sm:$0xf]
  %v292 = vld [vmem:[%s3 + $0x74] sm:$0xf]
  %v293 = vld [vmem:[%s3 + $0x78] sm:$0xf]
  %v294 = vld [vmem:[%s3 + $0x7c] sm:$0xf]
  %v295 = vld [vmem:[%s3 + $0x80] sm:$0xf]
  %v296 = vld [vmem:[%s3 + $0x84] sm:$0xf]
  %v297 = vld [vmem:[%s3 + $0x88] sm:$0xf]
  %v298 = vld [vmem:[%s3 + $0x8c] sm:$0xf]
  %v299 = vld [vmem:[%s3 + $0x90] sm:$0xf]
  %v300 = vld [vmem:[%s3 + $0x94] sm:$0xf]
  %v301 = vld [vmem:[%s3 + $0x98] sm:$0xf]
  %v302 = vld [vmem:[%s3 + $0x9c] sm:$0xf]
  %v303 = vld [vmem:[%s3 + $0xa0] sm:$0xf]
  %v304 = vld [vmem:[%s3 + $0xa4] sm:$0xf]
  %v305 = vld [vmem:[%s3 + $0xa8] sm:$0xf]
  %v306 = vld [vmem:[%s3 + $0xac] sm:$0xf]
  %v307 = vld [vmem:[%s3 + $0xb0] sm:$0xf]
  %v308 = vld [vmem:[%s3 + $0xb4] sm:$0xf]
  %v309 = vld [vmem:[%s3 + $0xb8] sm:$0xf]
  %v310 = vld [vmem:[%s3 + $0xbc] sm:$0xf]
  %v311 = vld [vmem:[%s3 + $0xc0] sm:$0xf]
  %v312 = vld [vmem:[%s3 + $0xc4] sm:$0xf]
  %v313 = vld [vmem:[%s3 + $0xc8] sm:$0xf]
  %v314 = vld [vmem:[%s3 + $0xcc] sm:$0xf]
  %v315 = vld [vmem:[%s3 + $0xd0] sm:$0xf]
  %v316 = vld [vmem:[%s3 + $0xd4] sm:$0xf]
  %v317 = vld [vmem:[%s3 + $0xd8] sm:$0xf]
  %v318 = vld [vmem:[%s3 + $0xdc] sm:$0xf]
  %v319 = vld [vmem:[%s3 + $0xe0] sm:$0xf]
  %v320 = vld [vmem:[%s3 + $0xe4] sm:$0xf]
  %v321 = vld [vmem:[%s3 + $0xe8] sm:$0xf]
  %v322 = vld [vmem:[%s3 + $0xec] sm:$0xf]
  %v323 = vld [vmem:[%s3 + $0xf0] sm:$0xf]
  %v324 = vld [vmem:[%s3 + $0xf4] sm:$0xf]
  %v325 = vld [vmem:[%s3 + $0xf8] sm:$0xf]
  %v326 = vld [vmem:[%s3 + $0xfc] sm:$0xf]
  %v327 = vld [vmem:[%s3 + $0x100] sm:$0xf]
  %v328 = vld [vmem:[%s3 + $0x104] sm:$0xf]
  %v329 = vld [vmem:[%s3 + $0x108] sm:$0xf]
  %v330 = vld [vmem:[%s3 + $0x10c] sm:$0xf]
  %v331 = vld [vmem:[%s3 + $0x110] sm:$0xf]
  %v332 = vld [vmem:[%s3 + $0x114] sm:$0xf]
  %v333 = vld [vmem:[%s3 + $0x118] sm:$0xf]
  %v334 = vld [vmem:[%s3 + $0x11c] sm:$0xf]
  %v335 = vld [vmem:[%s3 + $0x120] sm:$0xf]
  %v336 = vld [vmem:[%s3 + $0x124] sm:$0xf]
  %v337 = vld [vmem:[%s3 + $0x128] sm:$0xf]
  %v338 = vld [vmem:[%s3 + $0x12c] sm:$0xf]
  %v339 = vld [vmem:[%s3 + $0x130] sm:$0xf]
  %v340 = vld [vmem:[%s3 + $0x134] sm:$0xf]
  %v341 = vld [vmem:[%s3 + $0x138] sm:$0xf]
  %v342 = vld [vmem:[%s3 + $0x13c] sm:$0xf]
  %v343 = vld [vmem:[%s3 + $0x140] sm:$0xf]
  %v344 = vld [vmem:[%s3 + $0x144] sm:$0xf]
  %v345 = vld [vmem:[%s3 + $0x148] sm:$0xf]
  %v346 = vld [vmem:[%s3 + $0x14c] sm:$0xf]
  %v347 = vld [vmem:[%s3 + $0x150] sm:$0xf]
  %v348 = vld [vmem:[%s3 + $0x154] sm:$0xf]
  %v349 = vld [vmem:[%s3 + $0x158] sm:$0xf]
  %v350 = vld [vmem:[%s3 + $0x15c] sm:$0xf]
  %v351 = vld [vmem:[%s3 + $0x160] sm:$0xf]
  %v352 = vld [vmem:[%s3 + $0x164] sm:$0xf]
  %v353 = vld [vmem:[%s3 + $0x168] sm:$0xf]
  %v354 = vld [vmem:[%s3 + $0x16c] sm:$0xf]
  %v355 = vld [vmem:[%s3 + $0x170] sm:$0xf]
  %v356 = vld [vmem:[%s3 + $0x174] sm:$0xf]
  %v357 = vld [vmem:[%s3 + $0x178] sm:$0xf]
  %v358 = vld [vmem:[%s3 + $0x17c] sm:$0xf]
  %v359 = vld [vmem:[%s3 + $0x180] sm:$0xf]
  %v360 = vld [vmem:[%s3 + $0x184] sm:$0xf]
  %v361 = vld [vmem:[%s3 + $0x188] sm:$0xf]
  %v362 = vld [vmem:[%s3 + $0x18c] sm:$0xf]
  %v363 = vld [vmem:[%s3 + $0x190] sm:$0xf]
  %v364 = vld [vmem:[%s3 + $0x194] sm:$0xf]
  %v365 = vld [vmem:[%s3 + $0x198] sm:$0xf]
  %v366 = vld [vmem:[%s3 + $0x19c] sm:$0xf]
  %v367 = vld [vmem:[%s3 + $0x1a0] sm:$0xf]
  %v368 = vld [vmem:[%s3 + $0x1a4] sm:$0xf]
  %v369 = vld [vmem:[%s3 + $0x1a8] sm:$0xf]
  %v370 = vld [vmem:[%s3 + $0x1ac] sm:$0xf]
  %v371 = vld [vmem:[%s3 + $0x1b0] sm:$0xf]
  %v372 = vld [vmem:[%s3 + $0x1b4] sm:$0xf]
  %v373 = vld [vmem:[%s3 + $0x1b8] sm:$0xf]
  %v374 = vld [vmem:[%s3 + $0x1bc] sm:$0xf]
  %v375 = vld [vmem:[%s4] sm:$0x1]
  %v377 = vperm.slane %v375, 0
  %v491 = vunpack.c.l.b16 %v263
  %v492 = vunpack.c.l.b16 %v264
  %v493 = vunpack.c.l.b16 %v265
  %v494 = vunpack.c.l.b16 %v266
  %v495 = vunpack.c.l.b16 %v267
  %v496 = vunpack.c.l.b16 %v268
  %v497 = vunpack.c.l.b16 %v269
  %v498 = vunpack.c.l.b16 %v270
  %v499 = vunpack.c.l.b16 %v271
  %v500 = vunpack.c.l.b16 %v272
  %v501 = vunpack.c.l.b16 %v273
  %v502 = vunpack.c.l.b16 %v274
  %v503 = vunpack.c.l.b16 %v275
  %v504 = vunpack.c.l.b16 %v276
  %v505 = vunpack.c.l.b16 %v277
  %v506 = vunpack.c.l.b16 %v278
  %v507 = vunpack.c.l.b16 %v279
  %v508 = vunpack.c.l.b16 %v280
  %v509 = vunpack.c.l.b16 %v281
  %v510 = vunpack.c.l.b16 %v282
  %v511 = vunpack.c.l.b16 %v283
  %v512 = vunpack.c.l.b16 %v284
  %v513 = vunpack.c.l.b16 %v285
  %v514 = vunpack.c.l.b16 %v286
  %v515 = vunpack.c.l.b16 %v287
  %v516 = vunpack.c.l.b16 %v288
  %v517 = vunpack.c.l.b16 %v289
  %v518 = vunpack.c.l.b16 %v290
  %v519 = vunpack.c.l.b16 %v291
  %v520 = vunpack.c.l.b16 %v292
  %v521 = vunpack.c.l.b16 %v293
  %v522 = vunpack.c.l.b16 %v294
  %v523 = vunpack.c.l.b16 %v295
  %v524 = vunpack.c.l.b16 %v296
  %v525 = vunpack.c.l.b16 %v297
  %v526 = vunpack.c.l.b16 %v298
  %v527 = vunpack.c.l.b16 %v299
  %v528 = vunpack.c.l.b16 %v300
  %v529 = vunpack.c.l.b16 %v301
  %v530 = vunpack.c.l.b16 %v302
  %v531 = vunpack.c.l.b16 %v303
  %v532 = vunpack.c.l.b16 %v304
  %v533 = vunpack.c.l.b16 %v305
  %v534 = vunpack.c.l.b16 %v306
  %v535 = vunpack.c.l.b16 %v307
  %v536 = vunpack.c.l.b16 %v308
  %v537 = vunpack.c.l.b16 %v309
  %v538 = vunpack.c.l.b16 %v310
  %v539 = vunpack.c.l.b16 %v311
  %v540 = vunpack.c.l.b16 %v312
  %v541 = vunpack.c.l.b16 %v313
  %v542 = vunpack.c.l.b16 %v314
  %v543 = vunpack.c.l.b16 %v315
  %v544 = vunpack.c.l.b16 %v316
  %v545 = vunpack.c.l.b16 %v317
  %v546 = vunpack.c.l.b16 %v318
  %v547 = vunpack.c.l.b16 %v319
  %v548 = vunpack.c.l.b16 %v320
  %v549 = vunpack.c.l.b16 %v321
  %v550 = vunpack.c.l.b16 %v322
  %v551 = vunpack.c.l.b16 %v323
  %v552 = vunpack.c.l.b16 %v324
  %v553 = vunpack.c.l.b16 %v325
  %v554 = vunpack.c.l.b16 %v326
  %v555 = vunpack.c.l.b16 %v327
  %v556 = vunpack.c.l.b16 %v328
  %v557 = vunpack.c.l.b16 %v329
  %v558 = vunpack.c.l.b16 %v330
  %v559 = vunpack.c.l.b16 %v331
  %v560 = vunpack.c.l.b16 %v332
  %v561 = vunpack.c.l.b16 %v333
  %v562 = vunpack.c.l.b16 %v334
  %v563 = vunpack.c.l.b16 %v335
  %v564 = vunpack.c.l.b16 %v336
  %v565 = vunpack.c.l.b16 %v337
  %v566 = vunpack.c.l.b16 %v338
  %v567 = vunpack.c.l.b16 %v339
  %v568 = vunpack.c.l.b16 %v340
  %v569 = vunpack.c.l.b16 %v341
  %v570 = vunpack.c.l.b16 %v342
  %v571 = vunpack.c.l.b16 %v343
  %v572 = vunpack.c.l.b16 %v344
  %v573 = vunpack.c.l.b16 %v345
  %v574 = vunpack.c.l.b16 %v346
  %v575 = vunpack.c.l.b16 %v347
  %v576 = vunpack.c.l.b16 %v348
  %v577 = vunpack.c.l.b16 %v349
  %v578 = vunpack.c.l.b16 %v350
  %v579 = vunpack.c.l.b16 %v351
  %v580 = vunpack.c.l.b16 %v352
  %v581 = vunpack.c.l.b16 %v353
  %v582 = vunpack.c.l.b16 %v354
  %v583 = vunpack.c.l.b16 %v355
  %v584 = vunpack.c.l.b16 %v356
  %v585 = vunpack.c.l.b16 %v357
  %v586 = vunpack.c.l.b16 %v358
  %v587 = vunpack.c.l.b16 %v359
  %v588 = vunpack.c.l.b16 %v360
  %v589 = vunpack.c.l.b16 %v361
  %v590 = vunpack.c.l.b16 %v362
  %v591 = vunpack.c.l.b16 %v363
  %v592 = vunpack.c.l.b16 %v364
  %v593 = vunpack.c.l.b16 %v365
  %v594 = vunpack.c.l.b16 %v366
  %v595 = vunpack.c.l.b16 %v367
  %v596 = vunpack.c.l.b16 %v368
  %v597 = vunpack.c.l.b16 %v369
  %v598 = vunpack.c.l.b16 %v370
  %v599 = vunpack.c.l.b16 %v371
  %v600 = vunpack.c.l.b16 %v372
  %v601 = vunpack.c.l.b16 %v373
  %v602 = vunpack.c.l.b16 %v374
  %v603 = vpack.c.b16 %v492, %v491
  %v604 = vpack.c.b16 %v494, %v493
  %v605 = vpack.c.b16 %v496, %v495
  %v606 = vpack.c.b16 %v498, %v497
  %v607 = vpack.c.b16 %v500, %v499
  %v608 = vpack.c.b16 %v502, %v501
  %v609 = vpack.c.b16 %v504, %v503
  %v610 = vpack.c.b16 %v506, %v505
  %v611 = vpack.c.b16 %v508, %v507
  %v612 = vpack.c.b16 %v510, %v509
  %v613 = vpack.c.b16 %v512, %v511
  %v614 = vpack.c.b16 %v514, %v513
  %v615 = vpack.c.b16 %v516, %v515
  %v616 = vpack.c.b16 %v518, %v517
  %v617 = vpack.c.b16 %v520, %v519
  %v618 = vpack.c.b16 %v522, %v521
  %v619 = vpack.c.b16 %v524, %v523
  %v620 = vpack.c.b16 %v526, %v525
  %v621 = vpack.c.b16 %v528, %v527
  %v622 = vpack.c.b16 %v530, %v529
  %v623 = vpack.c.b16 %v532, %v531
  %v624 = vpack.c.b16 %v534, %v533
  %v625 = vpack.c.b16 %v536, %v535
  %v626 = vpack.c.b16 %v538, %v537
  %v627 = vpack.c.b16 %v540, %v539
  %v628 = vpack.c.b16 %v542, %v541
  %v629 = vpack.c.b16 %v544, %v543
  %v630 = vpack.c.b16 %v546, %v545
  %v631 = vpack.c.b16 %v548, %v547
  %v632 = vpack.c.b16 %v550, %v549
  %v633 = vpack.c.b16 %v552, %v551
  %v634 = vpack.c.b16 %v554, %v553
  %v635 = vpack.c.b16 %v556, %v555
  %v636 = vpack.c.b16 %v558, %v557
  %v637 = vpack.c.b16 %v560, %v559
  %v638 = vpack.c.b16 %v562, %v561
  %v639 = vpack.c.b16 %v564, %v563
  %v640 = vpack.c.b16 %v566, %v565
  %v641 = vpack.c.b16 %v568, %v567
  %v642 = vpack.c.b16 %v570, %v569
  %v643 = vpack.c.b16 %v572, %v571
  %v644 = vpack.c.b16 %v574, %v573
  %v645 = vpack.c.b16 %v576, %v575
  %v646 = vpack.c.b16 %v578, %v577
  %v647 = vpack.c.b16 %v580, %v579
  %v648 = vpack.c.b16 %v582, %v581
  %v649 = vpack.c.b16 %v584, %v583
  %v650 = vpack.c.b16 %v586, %v585
  %v651 = vpack.c.b16 %v588, %v587
  %v652 = vpack.c.b16 %v590, %v589
  %v653 = vpack.c.b16 %v592, %v591
  %v654 = vpack.c.b16 %v594, %v593
  %v655 = vpack.c.b16 %v596, %v595
  %v656 = vpack.c.b16 %v598, %v597
  %v657 = vpack.c.b16 %v600, %v599
  %v658 = vpack.c.b16 %v602, %v601
  %715 = vmatpush.bf16.msra.mxu0 %v610
  %716 = vmatpush.bf16.msra.mxu0 %v609
  %717 = vmatpush.bf16.msra.mxu0 %v608
  %718 = vmatpush.bf16.msra.mxu0 %v607
  %719 = vmatpush.bf16.msra.mxu0 %v606
  %720 = vmatpush.bf16.msra.mxu0 %v605
  %721 = vmatpush.bf16.msra.mxu0 %v604
  %722 = vmatpush.bf16.msra.mxu0 %v603
  %723 = vmatmul.bf16.gmra.mxu0 %v256
  %v724 = vpop.f32.mrf.mxu0
  %v725 = vadd.f32 %v377, %v724
  %v726 = vpop.f32.mrf.mxu0
  %727 = vdwg.mxu0
  %728 = vmatpush.bf16.msra.mxu0 %v618
  %729 = vmatpush.bf16.msra.mxu0 %v617
  %730 = vmatpush.bf16.msra.mxu0 %v616
  %731 = vmatpush.bf16.msra.mxu0 %v615
  %732 = vmatpush.bf16.msra.mxu0 %v614
  %733 = vmatpush.bf16.msra.mxu0 %v613
  %734 = vmatpush.bf16.msra.mxu0 %v612
  %735 = vmatpush.bf16.msra.mxu0 %v611
  %736 = vmatmul.bf16.gmra.mxu0 %v257
  %v737 = vpop.f32.mrf.mxu0
  %v738 = vadd.f32 %v725, %v737
  %v739 = vpop.f32.mrf.mxu0
  %740 = vdwg.mxu0
  %741 = vmatpush.bf16.msra.mxu0 %v626
  %742 = vmatpush.bf16.msra.mxu0 %v625
  %743 = vmatpush.bf16.msra.mxu0 %v624
  %744 = vmatpush.bf16.msra.mxu0 %v623
  %745 = vmatpush.bf16.msra.mxu0 %v622
  %746 = vmatpush.bf16.msra.mxu0 %v621
  %747 = vmatpush.bf16.msra.mxu0 %v620
  %748 = vmatpush.bf16.msra.mxu0 %v619
  %749 = vmatmul.bf16.gmra.mxu0 %v258
  %v750 = vpop.f32.mrf.mxu0
  %v751 = vadd.f32 %v738, %v750
  %v752 = vpop.f32.mrf.mxu0
  %753 = vdwg.mxu0
  %754 = vmatpush.bf16.msra.mxu0 %v634
  %755 = vmatpush.bf16.msra.mxu0 %v633
  %756 = vmatpush.bf16.msra.mxu0 %v632
  %757 = vmatpush.bf16.msra.mxu0 %v631
  %758 = vmatpush.bf16.msra.mxu0 %v630
  %759 = vmatpush.bf16.msra.mxu0 %v629
  %760 = vmatpush.bf16.msra.mxu0 %v628
  %761 = vmatpush.bf16.msra.mxu0 %v627
  %762 = vmatmul.bf16.gmra.mxu0 %v259
  %v763 = vpop.f32.mrf.mxu0
  %v764 = vadd.f32 %v751, %v763
  %v765 = vpop.f32.mrf.mxu0
  %766 = vdwg.mxu0
  %767 = vmatpush.bf16.msra.mxu0 %v642
  %768 = vmatpush.bf16.msra.mxu0 %v641
  %769 = vmatpush.bf16.msra.mxu0 %v640
  %770 = vmatpush.bf16.msra.mxu0 %v639
  %771 = vmatpush.bf16.msra.mxu0 %v638
  %772 = vmatpush.bf16.msra.mxu0 %v637
  %773 = vmatpush.bf16.msra.mxu0 %v636
  %774 = vmatpush.bf16.msra.mxu0 %v635
  %775 = vmatmul.bf16.gmra.mxu0 %v260
  %v776 = vpop.f32.mrf.mxu0
  %v777 = vadd.f32 %v764, %v776
  %v778 = vpop.f32.mrf.mxu0
  %779 = vdwg.mxu0
  %780 = vmatpush.bf16.msra.mxu0 %v650
  %781 = vmatpush.bf16.msra.mxu0 %v649
  %782 = vmatpush.bf16.msra.mxu0 %v648
  %783 = vmatpush.bf16.msra.mxu0 %v647
  %784 = vmatpush.bf16.msra.mxu0 %v646
  %785 = vmatpush.bf16.msra.mxu0 %v645
  %786 = vmatpush.bf16.msra.mxu0 %v644
  %787 = vmatpush.bf16.msra.mxu0 %v643
  %788 = vmatmul.bf16.gmra.mxu0 %v261
  %v789 = vpop.f32.mrf.mxu0
  %v790 = vadd.f32 %v777, %v789
  %v791 = vpop.f32.mrf.mxu0
  %792 = vdwg.mxu0
  %793 = vmatpush.bf16.msra.mxu0 %v658
  %794 = vmatpush.bf16.msra.mxu0 %v657
  %795 = vmatpush.bf16.msra.mxu0 %v656
  %796 = vmatpush.bf16.msra.mxu0 %v655
  %797 = vmatpush.bf16.msra.mxu0 %v654
  %798 = vmatpush.bf16.msra.mxu0 %v653
  %799 = vmatpush.bf16.msra.mxu0 %v652
  %800 = vmatpush.bf16.msra.mxu0 %v651
  %801 = vmatmul.bf16.gmra.mxu0 %v262
  %v802 = vpop.f32.mrf.mxu0
  %v803 = vadd.f32 %v790, %v802
  %v804 = vpop.f32.mrf.mxu0
  %805 = vdwg.mxu0
  %v806 = vmax.f32 %v803, 0.0
  %v807 = vpack.c.bf16 %v806, %v806
  %v808 = vld [vmem:[%s5] sm:$0xff]
  %v809 = vld [vmem:[%s5 + $0x8] sm:$0xff]
  %v810 = vld [vmem:[%s5 + $0x10] sm:$0xff]
  %v811 = vld [vmem:[%s5 + $0x18] sm:$0xff]
  %v812 = vld [vmem:[%s5 + $0x20] sm:$0xff]
  %v813 = vld [vmem:[%s5 + $0x28] sm:$0xff]
  %v814 = vld [vmem:[%s5 + $0x30] sm:$0xff]
  %v815 = vld [vmem:[%s5 + $0x38] sm:$0xff]
  %v816 = vld [vmem:[%s5 + $0x40] sm:$0xff]
  %v817 = vld [vmem:[%s5 + $0x48] sm:$0xff]
  %v818 = vld [vmem:[%s5 + $0x50] sm:$0xff]
  %v819 = vld [vmem:[%s5 + $0x58] sm:$0xff]
  %v820 = vld [vmem:[%s5 + $0x60] sm:$0xff]
  %v821 = vld [vmem:[%s5 + $0x68] sm:$0xff]
  %v822 = vld [vmem:[%s5 + $0x70] sm:$0xff]
  %v823 = vld [vmem:[%s5 + $0x78] sm:$0xff]
  %v824 = vld [vmem:[%s6] sm:$0x3]
  %v826 = vperm.slane %v824, 0
  %v827 = vperm.slane %v824, 1
  %v846 = vunpack.c.l.b16 %v808
  %v847 = vunpack.c.h.b16 %v808
  %v848 = vunpack.c.l.b16 %v809
  %v849 = vunpack.c.h.b16 %v809
  %v850 = vunpack.c.l.b16 %v810
  %v851 = vunpack.c.h.b16 %v810
  %v852 = vunpack.c.l.b16 %v811
  %v853 = vunpack.c.h.b16 %v811
  %v854 = vunpack.c.l.b16 %v812
  %v855 = vunpack.c.h.b16 %v812
  %v856 = vunpack.c.l.b16 %v813
  %v857 = vunpack.c.h.b16 %v813
  %v858 = vunpack.c.l.b16 %v814
  %v859 = vunpack.c.h.b16 %v814
  %v860 = vunpack.c.l.b16 %v815
  %v861 = vunpack.c.h.b16 %v815
  %v862 = vunpack.c.l.b16 %v816
  %v863 = vunpack.c.h.b16 %v816
  %v864 = vunpack.c.l.b16 %v817
  %v865 = vunpack.c.h.b16 %v817
  %v866 = vunpack.c.l.b16 %v818
  %v867 = vunpack.c.h.b16 %v818
  %v868 = vunpack.c.l.b16 %v819
  %v869 = vunpack.c.h.b16 %v819
  %v870 = vunpack.c.l.b16 %v820
  %v871 = vunpack.c.h.b16 %v820
  %v872 = vunpack.c.l.b16 %v821
  %v873 = vunpack.c.h.b16 %v821
  %v874 = vunpack.c.l.b16 %v822
  %v875 = vunpack.c.h.b16 %v822
  %v876 = vunpack.c.l.b16 %v823
  %v877 = vunpack.c.h.b16 %v823
  %v878 = vpack.c.b16 %v848, %v846
  %v879 = vpack.c.b16 %v849, %v847
  %v880 = vpack.c.b16 %v852, %v850
  %v881 = vpack.c.b16 %v853, %v851
  %v882 = vpack.c.b16 %v856, %v854
  %v883 = vpack.c.b16 %v857, %v855
  %v884 = vpack.c.b16 %v860, %v858
  %v885 = vpack.c.b16 %v861, %v859
  %v886 = vpack.c.b16 %v864, %v862
  %v887 = vpack.c.b16 %v865, %v863
  %v888 = vpack.c.b16 %v868, %v866
  %v889 = vpack.c.b16 %v869, %v867
  %v890 = vpack.c.b16 %v872, %v870
  %v891 = vpack.c.b16 %v873, %v871
  %v892 = vpack.c.b16 %v876, %v874
  %v893 = vpack.c.b16 %v877, %v875
  %910 = vmatpush.bf16.msra.mxu0 %v892
  %911 = vmatpush.bf16.msra.mxu0 %v890
  %912 = vmatpush.bf16.msra.mxu0 %v888
  %913 = vmatpush.bf16.msra.mxu0 %v886
  %914 = vmatpush.bf16.msra.mxu0 %v884
  %915 = vmatpush.bf16.msra.mxu0 %v882
  %916 = vmatpush.bf16.msra.mxu0 %v880
  %917 = vmatpush.bf16.msra.mxu0 %v878
  %918 = vmatmul.bf16.gmra.mxu0 %v807
  %v919 = vpop.f32.mrf.mxu0
  %v920 = vadd.f32 %v826, %v919
  %v921 = vpop.f32.mrf.mxu0
  %922 = vdwg.mxu0
  %923 = vmatpush.bf16.msra.mxu0 %v893
  %924 = vmatpush.bf16.msra.mxu0 %v891
  %925 = vmatpush.bf16.msra.mxu0 %v889
  %926 = vmatpush.bf16.msra.mxu0 %v887
  %927 = vmatpush.bf16.msra.mxu0 %v885
  %928 = vmatpush.bf16.msra.mxu0 %v883
  %929 = vmatpush.bf16.msra.mxu0 %v881
  %930 = vmatpush.bf16.msra.mxu0 %v879
  %931 = vmatmul.bf16.gmra.mxu0 %v807
  %v932 = vpop.f32.mrf.mxu0
  %v933 = vadd.f32 %v827, %v932
  %v934 = vpop.f32.mrf.mxu0
  %935 = vdwg.mxu0
  %v936 = vmax.f32 %v920, 0.0
  %v937 = vmax.f32 %v933, 0.0
  %v938 = vpack.c.bf16 %v936, %v936
  %v939 = vpack.c.bf16 %v937, %v937
  %v940 = vld [vmem:[%s7] sm:$0xf]
  %v941 = vld [vmem:[%s7 + $0x4] sm:$0xf]
  %v942 = vld [vmem:[%s7 + $0x8] sm:$0xf]
  %v943 = vld [vmem:[%s7 + $0xc] sm:$0xf]
  %v944 = vld [vmem:[%s7 + $0x10] sm:$0xf]
  %v945 = vld [vmem:[%s7 + $0x14] sm:$0xf]
  %v946 = vld [vmem:[%s7 + $0x18] sm:$0xf]
  %v947 = vld [vmem:[%s7 + $0x1c] sm:$0xf]
  %v948 = vld [vmem:[%s7 + $0x20] sm:$0xf]
  %v949 = vld [vmem:[%s7 + $0x24] sm:$0xf]
  %v950 = vld [vmem:[%s7 + $0x28] sm:$0xf]
  %v951 = vld [vmem:[%s7 + $0x2c] sm:$0xf]
  %v952 = vld [vmem:[%s7 + $0x30] sm:$0xf]
  %v953 = vld [vmem:[%s7 + $0x34] sm:$0xf]
  %v954 = vld [vmem:[%s7 + $0x38] sm:$0xf]
  %v955 = vld [vmem:[%s7 + $0x3c] sm:$0xf]
  %v956 = vld [vmem:[%s7 + $0x40] sm:$0xf]
  %v957 = vld [vmem:[%s7 + $0x44] sm:$0xf]
  %v958 = vld [vmem:[%s7 + $0x48] sm:$0xf]
  %v959 = vld [vmem:[%s7 + $0x4c] sm:$0xf]
  %v960 = vld [vmem:[%s7 + $0x50] sm:$0xf]
  %v961 = vld [vmem:[%s7 + $0x54] sm:$0xf]
  %v962 = vld [vmem:[%s7 + $0x58] sm:$0xf]
  %v963 = vld [vmem:[%s7 + $0x5c] sm:$0xf]
  %v964 = vld [vmem:[%s7 + $0x60] sm:$0xf]
  %v965 = vld [vmem:[%s7 + $0x64] sm:$0xf]
  %v966 = vld [vmem:[%s7 + $0x68] sm:$0xf]
  %v967 = vld [vmem:[%s7 + $0x6c] sm:$0xf]
  %v968 = vld [vmem:[%s7 + $0x70] sm:$0xf]
  %v969 = vld [vmem:[%s7 + $0x74] sm:$0xf]
  %v970 = vld [vmem:[%s7 + $0x78] sm:$0xf]
  %v971 = vld [vmem:[%s7 + $0x7c] sm:$0xf]
  %v972 = vld [vmem:[%s8] sm:$0x1]
  %v974 = vperm.slane %v972, 0
  %v1008 = vunpack.c.l.b16 %v940
  %v1009 = vunpack.c.l.b16 %v941
  %v1010 = vunpack.c.l.b16 %v942
  %v1011 = vunpack.c.l.b16 %v943
  %v1012 = vunpack.c.l.b16 %v944
  %v1013 = vunpack.c.l.b16 %v945
  %v1014 = vunpack.c.l.b16 %v946
  %v1015 = vunpack.c.l.b16 %v947
  %v1016 = vunpack.c.l.b16 %v948
  %v1017 = vunpack.c.l.b16 %v949
  %v1018 = vunpack.c.l.b16 %v950
  %v1019 = vunpack.c.l.b16 %v951
  %v1020 = vunpack.c.l.b16 %v952
  %v1021 = vunpack.c.l.b16 %v953
  %v1022 = vunpack.c.l.b16 %v954
  %v1023 = vunpack.c.l.b16 %v955
  %v1024 = vunpack.c.l.b16 %v956
  %v1025 = vunpack.c.l.b16 %v957
  %v1026 = vunpack.c.l.b16 %v958
  %v1027 = vunpack.c.l.b16 %v959
  %v1028 = vunpack.c.l.b16 %v960
  %v1029 = vunpack.c.l.b16 %v961
  %v1030 = vunpack.c.l.b16 %v962
  %v1031 = vunpack.c.l.b16 %v963
  %v1032 = vunpack.c.l.b16 %v964
  %v1033 = vunpack.c.l.b16 %v965
  %v1034 = vunpack.c.l.b16 %v966
  %v1035 = vunpack.c.l.b16 %v967
  %v1036 = vunpack.c.l.b16 %v968
  %v1037 = vunpack.c.l.b16 %v969
  %v1038 = vunpack.c.l.b16 %v970
  %v1039 = vunpack.c.l.b16 %v971
  %v1040 = vpack.c.b16 %v1009, %v1008
  %v1041 = vpack.c.b16 %v1011, %v1010
  %v1042 = vpack.c.b16 %v1013, %v1012
  %v1043 = vpack.c.b16 %v1015, %v1014
  %v1044 = vpack.c.b16 %v1017, %v1016
  %v1045 = vpack.c.b16 %v1019, %v1018
  %v1046 = vpack.c.b16 %v1021, %v1020
  %v1047 = vpack.c.b16 %v1023, %v1022
  %v1048 = vpack.c.b16 %v1025, %v1024
  %v1049 = vpack.c.b16 %v1027, %v1026
  %v1050 = vpack.c.b16 %v1029, %v1028
  %v1051 = vpack.c.b16 %v1031, %v1030
  %v1052 = vpack.c.b16 %v1033, %v1032
  %v1053 = vpack.c.b16 %v1035, %v1034
  %v1054 = vpack.c.b16 %v1037, %v1036
  %v1055 = vpack.c.b16 %v1039, %v1038
  %1072 = vmatpush.bf16.msra.mxu0 %v1047
  %1073 = vmatpush.bf16.msra.mxu0 %v1046
  %1074 = vmatpush.bf16.msra.mxu0 %v1045
  %1075 = vmatpush.bf16.msra.mxu0 %v1044
  %1076 = vmatpush.bf16.msra.mxu0 %v1043
  %1077 = vmatpush.bf16.msra.mxu0 %v1042
  %1078 = vmatpush.bf16.msra.mxu0 %v1041
  %1079 = vmatpush.bf16.msra.mxu0 %v1040
  %1080 = vmatmul.bf16.gmra.mxu0 %v938
  %v1081 = vpop.f32.mrf.mxu0
  %v1082 = vadd.f32 %v974, %v1081
  %v1083 = vpop.f32.mrf.mxu0
  %1084 = vdwg.mxu0
  %1085 = vmatpush.bf16.msra.mxu0 %v1055
  %1086 = vmatpush.bf16.msra.mxu0 %v1054
  %1087 = vmatpush.bf16.msra.mxu0 %v1053
  %1088 = vmatpush.bf16.msra.mxu0 %v1052
  %1089 = vmatpush.bf16.msra.mxu0 %v1051
  %1090 = vmatpush.bf16.msra.mxu0 %v1050
  %1091 = vmatpush.bf16.msra.mxu0 %v1049
  %1092 = vmatpush.bf16.msra.mxu0 %v1048
  %1093 = vmatmul.bf16.gmra.mxu0 %v939
  %v1094 = vpop.f32.mrf.mxu0
  %v1095 = vadd.f32 %v1082, %v1094
  %v1096 = vpop.f32.mrf.mxu0
  %1097 = vdwg.mxu0
  %vm1098 = vcmp.ge.f32.partialorder %v1095, 0.0
  %v1099 = vmul.f32 %v1095, 0.22916667
  %v1100 = vsel %vm1098, %v1095, %v1099
  %1101 = vst [vmem:[%s9] sm:$0xff] %v1100
  // Predicated region
  $region38: #{cnn1d_forward.1} parent=0 // pred_check
    _
  $region39: #{cnn1d_forward.1} parent=0 // pred_check_branch
    %1103 = sbr.rel (0) target = $region41
  $region40: #{cnn1d_forward.1} parent=0 // pred_region
    _
  $region41: #{cnn1d_forward.1} parent=0 // pred_fallthru
    _
  // Predicated region
  $region42: #{cnn1d_forward.1} parent=0 // pred_check
    _
  $region43: #{cnn1d_forward.1} parent=0 // pred_check_branch
    %1105 = sbr.rel (0) target = $region45
  $region44: #{cnn1d_forward.1} parent=0 // pred_region
    _
  $region45: #{cnn1d_forward.1} parent=0 // pred_fallthru
    _

</llo_original>
